<compile_context>
chip_gen: v7x
topology: tpu7x:2x2x1
jax: 0.10.0
libtpu: 0.0.40
codegen_flags: <defaults>
</compile_context>

<pallas_src>
import jax
import jax.numpy as jnp
from jax.experimental import pallas as pl
from jax.experimental.pallas import tpu as pltpu

LN_EPS = 1e-5  # PyTorch nn.LayerNorm default


def _round_up(n, m):
    return ((n + m - 1) // m) * m


def hyper_tower_kernel(x_ref, w1_ref, b1_ref, g_ref, beta_ref,
                       w2_ref, b2_ref, w3_ref, b3_ref, o_ref):
    # fc1 (f32 MXU matmul, f32 accumulation).
    h = jnp.dot(x_ref[...], w1_ref[...],
                preferred_element_type=jnp.float32) + b1_ref[...]

    # LayerNorm over the hidden dim: two-pass variance (safe) + rsqrt on EUP.
    mean = jnp.mean(h, axis=-1, keepdims=True)
    centered = h - mean
    var = jnp.mean(centered * centered, axis=-1, keepdims=True)
    h = centered * jax.lax.rsqrt(var + LN_EPS)
    h = h * g_ref[...] + beta_ref[...]

    # ReLU (dropout = identity at inference).
    h = jnp.maximum(h, 0.0)

    # fc2.
    h2 = jnp.dot(h, w2_ref[...],
                 preferred_element_type=jnp.float32) + b2_ref[...]

    # LeakyReLU(0.1) (dropout = identity at inference).
    h2 = jnp.where(h2 > 0.0, h2, 0.1 * h2)

    # fc3: narrow (out_size-wide) store; masked vst is cheap, bytes are not.
    out = jnp.dot(h2, w3_ref[...],
                  preferred_element_type=jnp.float32) + b3_ref[...]
    o_ref[...] = out.astype(o_ref.dtype)


def _choose_tile_b(B, tile_b):
    """Pick a sublane-aligned batch tile; keep >=2 grid steps when possible."""
    tile_b = max(8, _round_up(tile_b, 8))
    tile_b = min(tile_b, _round_up(B, 8))          # never bigger than the batch
    if B > 8:
        # Cap so the grid has at least 2 steps -> both v7x TCs get work and
        # the pipeline can overlap DMA with compute (harmless on v5e/v6e).
        tile_b = min(tile_b, _round_up(pl.cdiv(B, 2), 8))
    return tile_b


def hyper_tower_forward(x, params, tile_b=4096):
    """x: [B, input_size] f32. params: dict of weights (see init_params)."""
    B, F = x.shape
    H = params["w1"].shape[1]
    H2 = params["w2"].shape[1]
    out_size = params["w3"].shape[1]

    tile_b = _choose_tile_b(B, tile_b)
    grid = (pl.cdiv(B, tile_b),)   # boundary block is clipped; OOB writes dropped

    args = (x, params["w1"], params["b1"], params["ln_g"], params["ln_b"],
            params["w2"], params["b2"], params["w3"], params["b3"])

    # x is tiled over the batch grid; every weight / bias / LN param is a
    # full-extent block with a constant index_map (resident in VMEM).
    def resident(a):
        return pl.BlockSpec(a.shape, lambda i: (0, 0))

    in_specs = [pl.BlockSpec((tile_b, F), lambda i: (i, 0))]
    in_specs += [resident(a) for a in args[1:]]
    out_specs = pl.BlockSpec((tile_b, out_size), lambda i: (i, 0))

    flops = 2 * B * (F * H + H * H2 + H2 * out_size)
    bytes_accessed = (int(x.size) * x.dtype.itemsize
                      + B * out_size * 4
                      + sum(int(a.size) * a.dtype.itemsize for a in args[1:]))
    cost = pl.CostEstimate(flops=flops, transcendentals=B,
                           bytes_accessed=bytes_accessed)

    return pl.pallas_call(
        hyper_tower_kernel,
        out_shape=jax.ShapeDtypeStruct((B, out_size), jnp.float32),
        grid=grid,
        in_specs=in_specs,
        out_specs=out_specs,
        compiler_params=pltpu.CompilerParams(
            dimension_semantics=("parallel",),      # megacore sharding on v7x
            vmem_limit_bytes=32 * 1024 * 1024,      # safe on v5e/v6e/v7x
        ),
        cost_estimate=cost,
    )(*args)


def xavier_normal(key, fan_in, fan_out):
    # matches torch.nn.init.xavier_normal_: std = sqrt(2 / (fan_in + fan_out))
    std = (2.0 / (fan_in + fan_out)) ** 0.5
    return std * jax.random.normal(key, (fan_in, fan_out), dtype=jnp.float32)


def init_params(key, input_size, output_size, hidden_size=32):
    k1, k2, k3 = jax.random.split(key, 3)
    half = hidden_size // 2
    return {
        # Linear weights stored as [in, out] (transposed vs. PyTorch [out, in]).
        "w1": xavier_normal(k1, input_size, hidden_size),
        "b1": jnp.zeros((1, hidden_size), jnp.float32),
        "ln_g": jnp.ones((1, hidden_size), jnp.float32),   # LayerNorm weight = 1
        "ln_b": jnp.zeros((1, hidden_size), jnp.float32),  # LayerNorm bias = 0
        "w2": xavier_normal(k2, hidden_size, half),
        "b2": jnp.zeros((1, half), jnp.float32),
        "w3": xavier_normal(k3, half, output_size),
        "b3": jnp.zeros((1, output_size), jnp.float32),
    }


def reference_forward(x, p):
    """Pure-JAX f32 reference mirroring the PyTorch module in eval() mode."""
    h = jnp.dot(x, p["w1"], preferred_element_type=jnp.float32) + p["b1"]
    mean = jnp.mean(h, axis=-1, keepdims=True)
    centered = h - mean
    var = jnp.mean(centered * centered, axis=-1, keepdims=True)
    h = centered * jax.lax.rsqrt(var + LN_EPS)
    h = h * p["ln_g"] + p["ln_b"]
    h = jnp.maximum(h, 0.0)
    h2 = jnp.dot(h, p["w2"], preferred_element_type=jnp.float32) + p["b2"]
    h2 = jnp.where(h2 > 0.0, h2, 0.1 * h2)
    return jnp.dot(h2, p["w3"], preferred_element_type=jnp.float32) + p["b3"]


if __name__ == "__main__":
    key = jax.random.PRNGKey(0)
    kx, kp, kx2 = jax.random.split(key, 3)

    B, input_size, hidden_size, output_size = 8, 16, 32, 4
    x = jax.random.normal(kx, (B, input_size), dtype=jnp.float32)
    params = init_params(kp, input_size, output_size, hidden_size)

    out = jax.block_until_ready(hyper_tower_forward(x, params))
    ref = reference_forward(x, params)
    assert out.shape == (B, output_size)
    # Tolerance covers MXU-vs-XLA f32 matmul precision differences.
    assert jnp.allclose(out, ref, atol=1e-2, rtol=1e-2)

    # Exercise the multi-step grid + clipped boundary-block path.
    B2 = 200
    x2 = jax.random.normal(kx2, (B2, input_size), dtype=jnp.float32)
    out2 = jax.block_until_ready(hyper_tower_forward(x2, params, tile_b=64))
    ref2 = reference_forward(x2, params)
    assert out2.shape == (B2, output_size)
    assert jnp.allclose(out2, ref2, atol=1e-2, rtol=1e-2)

    print("KERNEL_OK")
</pallas_src>

<mosaic_0001>
module attributes {stable_mosaic.version = 11 : i64} {
  func.func @hyper_tower_kernel(%arg0: i32, %arg1: memref<8x16xf32, #tpu.memory_space<vmem>>, %arg2: memref<16x32xf32, #tpu.memory_space<vmem>>, %arg3: memref<1x32xf32, #tpu.memory_space<vmem>>, %arg4: memref<1x32xf32, #tpu.memory_space<vmem>>, %arg5: memref<1x32xf32, #tpu.memory_space<vmem>>, %arg6: memref<32x16xf32, #tpu.memory_space<vmem>>, %arg7: memref<1x16xf32, #tpu.memory_space<vmem>>, %arg8: memref<16x4xf32, #tpu.memory_space<vmem>>, %arg9: memref<1x4xf32, #tpu.memory_space<vmem>>, %arg10: memref<8x4xf32, #tpu.memory_space<vmem>>) attributes {dimension_semantics = [#tpu.dimension_semantics<parallel>], iteration_bounds = array<i64: 1>, scalar_prefetch = 0 : i64, scratch_operands = 0 : i64, tpu.core_type = #tpu.core_type<tc>, window_params = [{transform_indices = @transform_0, window_bounds = array<i64: 8, 16>}, {pipeline_mode = #tpu.pipeline_mode<synchronous>, transform_indices = @transform_1, window_bounds = array<i64: 16, 32>}, {pipeline_mode = #tpu.pipeline_mode<synchronous>, transform_indices = @transform_2, window_bounds = array<i64: 1, 32>}, {pipeline_mode = #tpu.pipeline_mode<synchronous>, transform_indices = @transform_3, window_bounds = array<i64: 1, 32>}, {pipeline_mode = #tpu.pipeline_mode<synchronous>, transform_indices = @transform_4, window_bounds = array<i64: 1, 32>}, {pipeline_mode = #tpu.pipeline_mode<synchronous>, transform_indices = @transform_5, window_bounds = array<i64: 32, 16>}, {pipeline_mode = #tpu.pipeline_mode<synchronous>, transform_indices = @transform_6, window_bounds = array<i64: 1, 16>}, {pipeline_mode = #tpu.pipeline_mode<synchronous>, transform_indices = @transform_7, window_bounds = array<i64: 16, 4>}, {pipeline_mode = #tpu.pipeline_mode<synchronous>, transform_indices = @transform_8, window_bounds = array<i64: 1, 4>}, {transform_indices = @transform_9, window_bounds = array<i64: 8, 4>}]} {
    %c0 = arith.constant 0 : index
    %c0_0 = arith.constant 0 : index
    %0 = vector.load %arg1[%c0, %c0_0] : memref<8x16xf32, #tpu.memory_space<vmem>>, vector<8x16xf32>
    %c0_1 = arith.constant 0 : index
    %c0_2 = arith.constant 0 : index
    %1 = vector.load %arg2[%c0_1, %c0_2] : memref<16x32xf32, #tpu.memory_space<vmem>>, vector<16x32xf32>
    %cst = arith.constant dense<0.000000e+00> : vector<8x32xf32>
    %2 = tpu.matmul %0, %1, %cst {dimension_numbers = #tpu.dot_dimension_numbers<[1], [0], [0], [1], [0, 0, 1, 1], [], []>} : vector<8x16xf32>, vector<16x32xf32>, vector<8x32xf32> -> vector<8x32xf32>
    %c0_3 = arith.constant 0 : index
    %c0_4 = arith.constant 0 : index
    %3 = vector.load %arg3[%c0_3, %c0_4] : memref<1x32xf32, #tpu.memory_space<vmem>>, vector<1x32xf32>
    %4 = vector.broadcast %3 : vector<1x32xf32> to vector<8x32xf32>
    %5 = arith.addf %2, %4 : vector<8x32xf32>
    %cst_5 = arith.constant dense<0.000000e+00> : vector<8xf32>
    %6 = vector.multi_reduction <add>, %5, %cst_5 [1] : vector<8x32xf32> to vector<8xf32>
    %7 = vector.shape_cast %6 : vector<8xf32> to vector<8x1xf32>
    %cst_6 = arith.constant 3.200000e+01 : f32
    %8 = vector.broadcast %cst_6 : f32 to vector<8x1xf32>
    %9 = arith.divf %7, %8 : vector<8x1xf32>
    %10 = vector.broadcast %9 : vector<8x1xf32> to vector<8x32xf32>
    %11 = arith.subf %5, %10 : vector<8x32xf32>
    %12 = arith.mulf %11, %11 : vector<8x32xf32>
    %cst_7 = arith.constant dense<0.000000e+00> : vector<8xf32>
    %13 = vector.multi_reduction <add>, %12, %cst_7 [1] : vector<8x32xf32> to vector<8xf32>
    %14 = vector.shape_cast %13 : vector<8xf32> to vector<8x1xf32>
    %cst_8 = arith.constant 3.200000e+01 : f32
    %15 = vector.broadcast %cst_8 : f32 to vector<8x1xf32>
    %16 = arith.divf %14, %15 : vector<8x1xf32>
    %cst_9 = arith.constant 9.99999974E-6 : f32
    %17 = vector.broadcast %cst_9 : f32 to vector<8x1xf32>
    %18 = arith.addf %16, %17 : vector<8x1xf32>
    %19 = math.rsqrt %18 : vector<8x1xf32>
    %20 = vector.broadcast %19 : vector<8x1xf32> to vector<8x32xf32>
    %21 = arith.mulf %11, %20 : vector<8x32xf32>
    %c0_10 = arith.constant 0 : index
    %c0_11 = arith.constant 0 : index
    %22 = vector.load %arg4[%c0_10, %c0_11] : memref<1x32xf32, #tpu.memory_space<vmem>>, vector<1x32xf32>
    %23 = vector.broadcast %22 : vector<1x32xf32> to vector<8x32xf32>
    %24 = arith.mulf %21, %23 : vector<8x32xf32>
    %c0_12 = arith.constant 0 : index
    %c0_13 = arith.constant 0 : index
    %25 = vector.load %arg5[%c0_12, %c0_13] : memref<1x32xf32, #tpu.memory_space<vmem>>, vector<1x32xf32>
    %26 = vector.broadcast %25 : vector<1x32xf32> to vector<8x32xf32>
    %27 = arith.addf %24, %26 : vector<8x32xf32>
    %cst_14 = arith.constant 0.000000e+00 : f32
    %28 = vector.broadcast %cst_14 : f32 to vector<8x32xf32>
    %29 = arith.maximumf %27, %28 : vector<8x32xf32>
    %c0_15 = arith.constant 0 : index
    %c0_16 = arith.constant 0 : index
    %30 = vector.load %arg6[%c0_15, %c0_16] : memref<32x16xf32, #tpu.memory_space<vmem>>, vector<32x16xf32>
    %cst_17 = arith.constant dense<0.000000e+00> : vector<8x16xf32>
    %31 = tpu.matmul %29, %30, %cst_17 {dimension_numbers = #tpu.dot_dimension_numbers<[1], [0], [0], [1], [0, 0, 1, 1], [], []>} : vector<8x32xf32>, vector<32x16xf32>, vector<8x16xf32> -> vector<8x16xf32>
    %c0_18 = arith.constant 0 : index
    %c0_19 = arith.constant 0 : index
    %32 = vector.load %arg7[%c0_18, %c0_19] : memref<1x16xf32, #tpu.memory_space<vmem>>, vector<1x16xf32>
    %33 = vector.broadcast %32 : vector<1x16xf32> to vector<8x16xf32>
    %34 = arith.addf %31, %33 : vector<8x16xf32>
    %cst_20 = arith.constant 0.000000e+00 : f32
    %35 = vector.broadcast %cst_20 : f32 to vector<8x16xf32>
    %36 = arith.cmpf ogt, %34, %35 : vector<8x16xf32>
    %cst_21 = arith.constant 1.000000e-01 : f32
    %37 = vector.broadcast %cst_21 : f32 to vector<8x16xf32>
    %38 = arith.mulf %37, %34 : vector<8x16xf32>
    %39 = arith.select %36, %34, %38 : vector<8x16xi1>, vector<8x16xf32>
    %c0_22 = arith.constant 0 : index
    %c0_23 = arith.constant 0 : index
    %40 = vector.load %arg8[%c0_22, %c0_23] : memref<16x4xf32, #tpu.memory_space<vmem>>, vector<16x4xf32>
    %cst_24 = arith.constant dense<0.000000e+00> : vector<8x4xf32>
    %41 = tpu.matmul %39, %40, %cst_24 {dimension_numbers = #tpu.dot_dimension_numbers<[1], [0], [0], [1], [0, 0, 1, 1], [], []>} : vector<8x16xf32>, vector<16x4xf32>, vector<8x4xf32> -> vector<8x4xf32>
    %c0_25 = arith.constant 0 : index
    %c0_26 = arith.constant 0 : index
    %42 = vector.load %arg9[%c0_25, %c0_26] : memref<1x4xf32, #tpu.memory_space<vmem>>, vector<1x4xf32>
    %43 = vector.broadcast %42 : vector<1x4xf32> to vector<8x4xf32>
    %44 = arith.addf %41, %43 : vector<8x4xf32>
    %c0_27 = arith.constant 0 : index
    %c0_28 = arith.constant 0 : index
    %45 = vector.load %arg10[%c0_27, %c0_28] : memref<8x4xf32, #tpu.memory_space<vmem>>, vector<8x4xf32>
    tpu.vector_store %arg10[%c0_27, %c0_28], %44 {strides = array<i32>} : memref<8x4xf32, #tpu.memory_space<vmem>>, vector<8x4xf32>,
    return
  }
  func.func @transform_0(%arg0: i32) -> (i32, i32) {
    %c0_i32 = arith.constant 0 : i32
    %c0_i32_0 = arith.constant 0 : i32
    return %arg0, %c0_i32 : i32, i32
  }
  func.func @transform_1(%arg0: i32) -> (i32, i32) {
    %c0_i32 = arith.constant 0 : i32
    %c0_i32_0 = arith.constant 0 : i32
    %c0_i32_1 = arith.constant 0 : i32
    return %c0_i32, %c0_i32_0 : i32, i32
  }
  func.func @transform_2(%arg0: i32) -> (i32, i32) {
    %c0_i32 = arith.constant 0 : i32
    %c0_i32_0 = arith.constant 0 : i32
    %c0_i32_1 = arith.constant 0 : i32
    return %c0_i32, %c0_i32_0 : i32, i32
  }
  func.func @transform_3(%arg0: i32) -> (i32, i32) {
    %c0_i32 = arith.constant 0 : i32
    %c0_i32_0 = arith.constant 0 : i32
    %c0_i32_1 = arith.constant 0 : i32
    return %c0_i32, %c0_i32_0 : i32, i32
  }
  func.func @transform_4(%arg0: i32) -> (i32, i32) {
    %c0_i32 = arith.constant 0 : i32
    %c0_i32_0 = arith.constant 0 : i32
    %c0_i32_1 = arith.constant 0 : i32
    return %c0_i32, %c0_i32_0 : i32, i32
  }
  func.func @transform_5(%arg0: i32) -> (i32, i32) {
    %c0_i32 = arith.constant 0 : i32
    %c0_i32_0 = arith.constant 0 : i32
    %c0_i32_1 = arith.constant 0 : i32
    return %c0_i32, %c0_i32_0 : i32, i32
  }
  func.func @transform_6(%arg0: i32) -> (i32, i32) {
    %c0_i32 = arith.constant 0 : i32
    %c0_i32_0 = arith.constant 0 : i32
    %c0_i32_1 = arith.constant 0 : i32
    return %c0_i32, %c0_i32_0 : i32, i32
  }
  func.func @transform_7(%arg0: i32) -> (i32, i32) {
    %c0_i32 = arith.constant 0 : i32
    %c0_i32_0 = arith.constant 0 : i32
    %c0_i32_1 = arith.constant 0 : i32
    return %c0_i32, %c0_i32_0 : i32, i32
  }
  func.func @transform_8(%arg0: i32) -> (i32, i32) {
    %c0_i32 = arith.constant 0 : i32
    %c0_i32_0 = arith.constant 0 : i32
    %c0_i32_1 = arith.constant 0 : i32
    return %c0_i32, %c0_i32_0 : i32, i32
  }
  func.func @transform_9(%arg0: i32) -> (i32, i32) {
    %c0_i32 = arith.constant 0 : i32
    %c0_i32_0 = arith.constant 0 : i32
    return %arg0, %c0_i32 : i32, i32
  }
}

</mosaic_0001>

<llo_original>
// kernel: tpu_custom_call.1
$region0: #{tpu_custom_call.1}
  #allocation0 [shape = 'u32[]', space=smem, size = 0x4, offset = 0x4, fixed_abs, tag = 'smem constant byte address 0x4 - core index']
  #allocation1 [shape = 'u32[144,128]{1,0:T(1,128)}', space=vmem, size = 0x12000, scoped, tag = 'internal scratch']
  %s0 = inlined_call_operand.vmem [shape: f32[8,16], index: 0, kind: input, shape index: {}]
  %s1 = inlined_call_operand.vmem [shape: f32[16,32], index: 1, kind: input, shape index: {}]
  %s2 = inlined_call_operand.vmem [shape: f32[1,32], index: 2, kind: input, shape index: {}]
  %s3 = inlined_call_operand.vmem [shape: f32[1,32], index: 3, kind: input, shape index: {}]
  %s4 = inlined_call_operand.vmem [shape: f32[1,32], index: 4, kind: input, shape index: {}]
  %s5 = inlined_call_operand.vmem [shape: f32[32,16], index: 5, kind: input, shape index: {}]
  %s6 = inlined_call_operand.vmem [shape: f32[1,16], index: 6, kind: input, shape index: {}]
  %s7 = inlined_call_operand.vmem [shape: f32[16,4], index: 7, kind: input, shape index: {}]
  %s8 = inlined_call_operand.vmem [shape: f32[1,4], index: 8, kind: input, shape index: {}]
  %s9 = inlined_call_operand.vmem [shape: f32[8,4], index: 9, kind: output, shape index: {}]
  %s10 = sld [smem:[#allocation0]]
  $region46: #{tpu_custom_call.1} parent=0
    _
  %s12 = ssub.s32 1, %s10
  %s13 = scalar_select 0, %s12, %s10
  // Predicated region
  $region2: #{tpu_custom_call.1} parent=0 // pred_check
    _
  $region3: #{tpu_custom_call.1} parent=0 // pred_check_branch
    %15 = sbr.rel (0) target = $region5
  $region4: #{tpu_custom_call.1} parent=0 // pred_region
    _
  $region5: #{tpu_custom_call.1} parent=0 // pred_fallthru
    _
  // Predicated region
  $region6: #{tpu_custom_call.1} parent=0 // pred_check
    _
  $region7: #{tpu_custom_call.1} parent=0 // pred_check_branch
    %17 = sbr.rel (0) target = $region9
  $region8: #{tpu_custom_call.1} parent=0 // pred_region
    _
  $region9: #{tpu_custom_call.1} parent=0 // pred_fallthru
    _
  // Predicated region
  $region10: #{tpu_custom_call.1} parent=0 // pred_check
    _
  $region11: #{tpu_custom_call.1} parent=0 // pred_check_branch
    %19 = sbr.rel (0) target = $region13
  $region12: #{tpu_custom_call.1} parent=0 // pred_region
    _
  $region13: #{tpu_custom_call.1} parent=0 // pred_fallthru
    _
  // Predicated region
  $region14: #{tpu_custom_call.1} parent=0 // pred_check
    _
  $region15: #{tpu_custom_call.1} parent=0 // pred_check_branch
    %21 = sbr.rel (0) target = $region17
  $region16: #{tpu_custom_call.1} parent=0 // pred_region
    _
  $region17: #{tpu_custom_call.1} parent=0 // pred_fallthru
    _
  // Predicated region
  $region18: #{tpu_custom_call.1} parent=0 // pred_check
    _
  $region19: #{tpu_custom_call.1} parent=0 // pred_check_branch
    %23 = sbr.rel (0) target = $region21
  $region20: #{tpu_custom_call.1} parent=0 // pred_region
    _
  $region21: #{tpu_custom_call.1} parent=0 // pred_fallthru
    _
  // Predicated region
  $region22: #{tpu_custom_call.1} parent=0 // pred_check
    _
  $region23: #{tpu_custom_call.1} parent=0 // pred_check_branch
    %25 = sbr.rel (0) target = $region25
  $region24: #{tpu_custom_call.1} parent=0 // pred_region
    _
  $region25: #{tpu_custom_call.1} parent=0 // pred_fallthru
    _
  // Predicated region
  $region26: #{tpu_custom_call.1} parent=0 // pred_check
    _
  $region27: #{tpu_custom_call.1} parent=0 // pred_check_branch
    %27 = sbr.rel (0) target = $region29
  $region28: #{tpu_custom_call.1} parent=0 // pred_region
    _
  $region29: #{tpu_custom_call.1} parent=0 // pred_fallthru
    _
  // Predicated region
  $region30: #{tpu_custom_call.1} parent=0 // pred_check
    _
  $region31: #{tpu_custom_call.1} parent=0 // pred_check_branch
    %29 = sbr.rel (0) target = $region33
  $region32: #{tpu_custom_call.1} parent=0 // pred_region
    _
  $region33: #{tpu_custom_call.1} parent=0 // pred_fallthru
    _
  // Predicated region
  $region34: #{tpu_custom_call.1} parent=0 // pred_check
    _
  $region35: #{tpu_custom_call.1} parent=0 // pred_check_branch
    %31 = sbr.rel (0) target = $region37
  $region36: #{tpu_custom_call.1} parent=0 // pred_region
    _
  $region37: #{tpu_custom_call.1} parent=0 // pred_fallthru
    _
  %v32 = vld [vmem:[%s0] sm:$0xff]
  %v33 = vld [vmem:[%s1] sm:$0xff]
  %v34 = vld [vmem:[%s1 + $0x8] sm:$0xff]
  %v35 = vld [vmem:[%s2] sm:$0x1]
  %v37 = vlaneseq
  %v38 = vshrl.u32 %v37, 7
  %v39 = vsub.s32 0, %v38
  %v40 = vrot.slane %v35, %v39
  %vm42 = vcmask 130048
  %v44 = vsel %vm42, %v32, 0
  %46 = vmatprep.subr.mxu0 0.0
  %47 = vmatpush1.msra.mxu0 %v33
  %48 = vmatprep.subr.mxu0 0.0
  %49 = vmatpush1.msra.mxu0 %v34
  %50 = vmatprep.subr.mxu0 0.0
  %51 = vmatpush1.msra.mxu0 0.0
  %52 = vmatprep.subr.mxu0 0.0
  %53 = vmatpush1.msra.mxu0 0.0
  %54 = vmatprep.subr.mxu0 0.0
  %55 = vmatpush1.msra.mxu0 0.0
  %56 = vmatprep.subr.mxu0 0.0
  %57 = vmatpush1.msra.mxu0 0.0
  %58 = vmatprep.subr.mxu0 0.0
  %59 = vmatpush1.msra.mxu0 0.0
  %60 = vmatprep.subr.mxu0 0.0
  %61 = vmatpush1.msra.mxu0 0.0
  %62 = vmatprep.subr.mxu0 0.0
  %63 = vmatpush1.msra.mxu0 0.0
  %64 = vmatprep.subr.mxu0 0.0
  %65 = vmatpush1.msra.mxu0 0.0
  %66 = vmatprep.subr.mxu0 0.0
  %67 = vmatpush1.msra.mxu0 0.0
  %68 = vmatprep.subr.mxu0 0.0
  %69 = vmatpush1.msra.mxu0 0.0
  %70 = vmatprep.subr.mxu0 0.0
  %71 = vmatpush1.msra.mxu0 0.0
  %72 = vmatprep.subr.mxu0 0.0
  %73 = vmatpush1.msra.mxu0 0.0
  %74 = vmatprep.subr.mxu0 0.0
  %75 = vmatpush1.msra.mxu0 0.0
  %76 = vmatprep.subr.mxu0 0.0
  %77 = vmatpush1.msra.mxu0 0.0
  %78 = vmatprep.subr.mxu0 0.0
  %79 = vmatpush1.msra.mxu0 0.0
  %80 = vmatprep.subr.mxu0 0.0
  %81 = vmatpush1.msra.mxu0 0.0
  %82 = vmatprep.subr.mxu0 0.0
  %83 = vmatpush1.msra.mxu0 0.0
  %84 = vmatprep.subr.mxu0 0.0
  %85 = vmatpush1.msra.mxu0 0.0
  %86 = vmatprep.subr.mxu0 0.0
  %87 = vmatpush1.msra.mxu0 0.0
  %88 = vmatprep.subr.mxu0 0.0
  %89 = vmatpush1.msra.mxu0 0.0
  %90 = vmatprep.subr.mxu0 0.0
  %91 = vmatpush1.msra.mxu0 0.0
  %92 = vmatprep.subr.mxu0 0.0
  %93 = vmatpush1.msra.mxu0 0.0
  %94 = vmatprep.subr.mxu0 0.0
  %95 = vmatpush1.msra.mxu0 0.0
  %96 = vmatprep.subr.mxu0 0.0
  %97 = vmatpush1.msra.mxu0 0.0
  %98 = vmatprep.subr.mxu0 0.0
  %99 = vmatpush1.msra.mxu0 0.0
  %100 = vmatprep.subr.mxu0 0.0
  %101 = vmatpush1.msra.mxu0 0.0
  %102 = vmatprep.subr.mxu0 0.0
  %103 = vmatpush1.msra.mxu0 0.0
  %104 = vmatprep.subr.mxu0 0.0
  %105 = vmatpush1.msra.mxu0 0.0
  %106 = vmatprep.subr.mxu0 0.0
  %107 = vmatpush1.msra.mxu0 0.0
  %108 = vmatprep.subr.mxu0 0.0
  %109 = vmatpush1.msra.mxu0 0.0
  %110 = vmatprep.mubr.f32.mxu0 0.0
  %111 = vmatmul.mubr.f32.gmra.mrb[0].mxu0 %v44
  %v112 = vpop.f32.mrb[0].mxu0
  %v113 = vadd.f32 %v40, %v112
  %v114 = vpop.f32.mrb[0].mxu0
  %115 = vdwg.mxu0
  %vm116 = vcmask 261120
  %v117 = vsel %vm116, %v113, 0.0
  %118 = vadd.xlane.f32.xlu0 %v117
  %v119 = vpop.xlane.xlu0 %118
  %v120 = vrcp.pop 32.0
  %v121 = vmul.f32 %v119, %v120
  %v122 = vsub.f32 %v113, %v121
  %v123 = vmul.f32 %v122, %v122
  %v124 = vsel %vm116, %v123, 0.0
  %125 = vadd.xlane.f32.xlu0 %v124
  %v126 = vpop.xlane.xlu0 %125
  %v127 = vmul.f32 %v126, %v120
  %v128 = vadd.f32 %v127, 1e-05
  %v129 = vrsqrt.pop %v128
  %v130 = vmul.f32 %v122, %v129
  %v131 = vld [vmem:[%s3] sm:$0x1]
  %v133 = vlaneseq
  %v134 = vshrl.u32 %v133, 7
  %v135 = vsub.s32 0, %v134
  %v136 = vrot.slane %v131, %v135
  %v138 = vmul.f32 %v130, %v136
  %v139 = vld [vmem:[%s4] sm:$0x1]
  %v141 = vlaneseq
  %v142 = vshrl.u32 %v141, 7
  %v143 = vsub.s32 0, %v142
  %v144 = vrot.slane %v139, %v143
  %v146 = vadd.f32 %v138, %v144
  %v147 = vmax.f32 %v146, 0.0
  %v148 = vld [vmem:[%s5] sm:$0xff]
  %v149 = vld [vmem:[%s5 + $0x8] sm:$0xff]
  %v150 = vld [vmem:[%s5 + $0x10] sm:$0xff]
  %v151 = vld [vmem:[%s5 + $0x18] sm:$0xff]
  %v152 = vld [vmem:[%s6] sm:$0x1]
  %v154 = vlaneseq
  %v155 = vshrl.u32 %v154, 7
  %v156 = vsub.s32 0, %v155
  %v157 = vrot.slane %v152, %v156
  %v160 = vsel %vm116, %v147, 0
  %162 = vmatprep.subr.mxu0 0.0
  %163 = vmatpush1.msra.mxu0 %v148
  %164 = vmatprep.subr.mxu0 0.0
  %165 = vmatpush1.msra.mxu0 %v149
  %166 = vmatprep.subr.mxu0 0.0
  %167 = vmatpush1.msra.mxu0 %v150
  %168 = vmatprep.subr.mxu0 0.0
  %169 = vmatpush1.msra.mxu0 %v151
  %170 = vmatprep.subr.mxu0 0.0
  %171 = vmatpush1.msra.mxu0 0.0
  %172 = vmatprep.subr.mxu0 0.0
  %173 = vmatpush1.msra.mxu0 0.0
  %174 = vmatprep.subr.mxu0 0.0
  %175 = vmatpush1.msra.mxu0 0.0
  %176 = vmatprep.subr.mxu0 0.0
  %177 = vmatpush1.msra.mxu0 0.0
  %178 = vmatprep.subr.mxu0 0.0
  %179 = vmatpush1.msra.mxu0 0.0
  %180 = vmatprep.subr.mxu0 0.0
  %181 = vmatpush1.msra.mxu0 0.0
  %182 = vmatprep.subr.mxu0 0.0
  %183 = vmatpush1.msra.mxu0 0.0
  %184 = vmatprep.subr.mxu0 0.0
  %185 = vmatpush1.msra.mxu0 0.0
  %186 = vmatprep.subr.mxu0 0.0
  %187 = vmatpush1.msra.mxu0 0.0
  %188 = vmatprep.subr.mxu0 0.0
  %189 = vmatpush1.msra.mxu0 0.0
  %190 = vmatprep.subr.mxu0 0.0
  %191 = vmatpush1.msra.mxu0 0.0
  %192 = vmatprep.subr.mxu0 0.0
  %193 = vmatpush1.msra.mxu0 0.0
  %194 = vmatprep.subr.mxu0 0.0
  %195 = vmatpush1.msra.mxu0 0.0
  %196 = vmatprep.subr.mxu0 0.0
  %197 = vmatpush1.msra.mxu0 0.0
  %198 = vmatprep.subr.mxu0 0.0
  %199 = vmatpush1.msra.mxu0 0.0
  %200 = vmatprep.subr.mxu0 0.0
  %201 = vmatpush1.msra.mxu0 0.0
  %202 = vmatprep.subr.mxu0 0.0
  %203 = vmatpush1.msra.mxu0 0.0
  %204 = vmatprep.subr.mxu0 0.0
  %205 = vmatpush1.msra.mxu0 0.0
  %206 = vmatprep.subr.mxu0 0.0
  %207 = vmatpush1.msra.mxu0 0.0
  %208 = vmatprep.subr.mxu0 0.0
  %209 = vmatpush1.msra.mxu0 0.0
  %210 = vmatprep.subr.mxu0 0.0
  %211 = vmatpush1.msra.mxu0 0.0
  %212 = vmatprep.subr.mxu0 0.0
  %213 = vmatpush1.msra.mxu0 0.0
  %214 = vmatprep.subr.mxu0 0.0
  %215 = vmatpush1.msra.mxu0 0.0
  %216 = vmatprep.subr.mxu0 0.0
  %217 = vmatpush1.msra.mxu0 0.0
  %218 = vmatprep.subr.mxu0 0.0
  %219 = vmatpush1.msra.mxu0 0.0
  %220 = vmatprep.subr.mxu0 0.0
  %221 = vmatpush1.msra.mxu0 0.0
  %222 = vmatprep.subr.mxu0 0.0
  %223 = vmatpush1.msra.mxu0 0.0
  %224 = vmatprep.subr.mxu0 0.0
  %225 = vmatpush1.msra.mxu0 0.0
  %226 = vmatprep.mubr.f32.mxu0 0.0
  %227 = vmatmul.mubr.f32.gmra.mrb[0].mxu0 %v160
  %v228 = vpop.f32.mrb[0].mxu0
  %v229 = vadd.f32 %v157, %v228
  %v230 = vpop.f32.mrb[0].mxu0
  %231 = vdwg.mxu0
  %vm232 = vcmp.gt.f32.partialorder %v229, 0.0
  %v233 = vmul.f32 %v229, 0.1
  %v234 = vsel %vm232, %v229, %v233
  %v235 = vld [vmem:[%s7] sm:$0xff]
  %v236 = vld [vmem:[%s7 + $0x8] sm:$0xff]
  %v237 = vld [vmem:[%s8] sm:$0x1]
  %v239 = vlaneseq
  %v240 = vshrl.u32 %v239, 7
  %v241 = vsub.s32 0, %v240
  %v242 = vrot.slane %v237, %v241
  %v245 = vsel %vm42, %v234, 0
  %247 = vmatprep.subr.mxu0 0.0
  %248 = vmatpush1.msra.mxu0 %v235
  %249 = vmatprep.subr.mxu0 0.0
  %250 = vmatpush1.msra.mxu0 %v236
  %251 = vmatprep.subr.mxu0 0.0
  %252 = vmatpush1.msra.mxu0 0.0
  %253 = vmatprep.subr.mxu0 0.0
  %254 = vmatpush1.msra.mxu0 0.0
  %255 = vmatprep.subr.mxu0 0.0
  %256 = vmatpush1.msra.mxu0 0.0
  %257 = vmatprep.subr.mxu0 0.0
  %258 = vmatpush1.msra.mxu0 0.0
  %259 = vmatprep.subr.mxu0 0.0
  %260 = vmatpush1.msra.mxu0 0.0
  %261 = vmatprep.subr.mxu0 0.0
  %262 = vmatpush1.msra.mxu0 0.0
  %263 = vmatprep.subr.mxu0 0.0
  %264 = vmatpush1.msra.mxu0 0.0
  %265 = vmatprep.subr.mxu0 0.0
  %266 = vmatpush1.msra.mxu0 0.0
  %267 = vmatprep.subr.mxu0 0.0
  %268 = vmatpush1.msra.mxu0 0.0
  %269 = vmatprep.subr.mxu0 0.0
  %270 = vmatpush1.msra.mxu0 0.0
  %271 = vmatprep.subr.mxu0 0.0
  %272 = vmatpush1.msra.mxu0 0.0
  %273 = vmatprep.subr.mxu0 0.0
  %274 = vmatpush1.msra.mxu0 0.0
  %275 = vmatprep.subr.mxu0 0.0
  %276 = vmatpush1.msra.mxu0 0.0
  %277 = vmatprep.subr.mxu0 0.0
  %278 = vmatpush1.msra.mxu0 0.0
  %279 = vmatprep.subr.mxu0 0.0
  %280 = vmatpush1.msra.mxu0 0.0
  %281 = vmatprep.subr.mxu0 0.0
  %282 = vmatpush1.msra.mxu0 0.0
  %283 = vmatprep.subr.mxu0 0.0
  %284 = vmatpush1.msra.mxu0 0.0
  %285 = vmatprep.subr.mxu0 0.0
  %286 = vmatpush1.msra.mxu0 0.0
  %287 = vmatprep.subr.mxu0 0.0
  %288 = vmatpush1.msra.mxu0 0.0
  %289 = vmatprep.subr.mxu0 0.0
  %290 = vmatpush1.msra.mxu0 0.0
  %291 = vmatprep.subr.mxu0 0.0
  %292 = vmatpush1.msra.mxu0 0.0
  %293 = vmatprep.subr.mxu0 0.0
  %294 = vmatpush1.msra.mxu0 0.0
  %295 = vmatprep.subr.mxu0 0.0
  %296 = vmatpush1.msra.mxu0 0.0
  %297 = vmatprep.subr.mxu0 0.0
  %298 = vmatpush1.msra.mxu0 0.0
  %299 = vmatprep.subr.mxu0 0.0
  %300 = vmatpush1.msra.mxu0 0.0
  %301 = vmatprep.subr.mxu0 0.0
  %302 = vmatpush1.msra.mxu0 0.0
  %303 = vmatprep.subr.mxu0 0.0
  %304 = vmatpush1.msra.mxu0 0.0
  %305 = vmatprep.subr.mxu0 0.0
  %306 = vmatpush1.msra.mxu0 0.0
  %307 = vmatprep.subr.mxu0 0.0
  %308 = vmatpush1.msra.mxu0 0.0
  %309 = vmatprep.subr.mxu0 0.0
  %310 = vmatpush1.msra.mxu0 0.0
  %311 = vmatprep.mubr.f32.mxu0 0.0
  %312 = vmatmul.mubr.f32.gmra.mrb[0].mxu0 %v245
  %v313 = vpop.f32.mrb[0].mxu0
  %v314 = vadd.f32 %v242, %v313
  %v315 = vpop.f32.mrb[0].mxu0
  %316 = vdwg.mxu0
  %vm317 = vcmask 31744
  %318 = vst.msk [vmem:[%s9] sm:$0xff] %vm317, %v314
  // Predicated region
  $region38: #{tpu_custom_call.1} parent=0 // pred_check
    _
  $region39: #{tpu_custom_call.1} parent=0 // pred_check_branch
    %320 = sbr.rel (0) target = $region41
  $region40: #{tpu_custom_call.1} parent=0 // pred_region
    _
  $region41: #{tpu_custom_call.1} parent=0 // pred_fallthru
    _
  // Predicated region
  $region42: #{tpu_custom_call.1} parent=0 // pred_check
    _
  $region43: #{tpu_custom_call.1} parent=0 // pred_check_branch
    %322 = sbr.rel (0) target = $region45
  $region44: #{tpu_custom_call.1} parent=0 // pred_region
    _
  $region45: #{tpu_custom_call.1} parent=0 // pred_fallthru
    _

</llo_original>
